<compile_context>
chip_gen: v5e
topology: v5e:2x2
jax: 0.10.0
libtpu: 0.0.40
codegen_flags: <defaults>
</compile_context>

<pallas_src>
import functools

import numpy as np
import jax
import jax.numpy as jnp
from jax import lax
from jax.experimental import pallas as pl
from jax.experimental.pallas import tpu as pltpu


def make_skconv_kernel(C, HW, M):
    inv_hw = 1.0 / float(HW)

    def kernel(col_ref, w_ref, scale_ref, shift_ref, fcwT_ref, fcb_ref,
               fcsw_ref, fcsb_ref, out_ref):
        # col_ref  : (1, TCp, HW) bf16   im2col of the padded input (1 batch elem)
        # w_ref    : (M*C, TCp)   bf16   fused per-branch, per-tap weights
        # scale_ref, shift_ref : (M*C, 1) f32   folded conv-bias + BatchNorm
        # fcwT_ref : (C, d)   fcb_ref : (1, d)
        # fcsw_ref : (M*C, d) fcsb_ref : (M*C, 1)
        # out_ref  : (1, C, HW) f32      NCHW (flattened spatially)
        col = col_ref[0]                                            # (TCp, HW)

        # ---- all M branch convolutions in ONE matmul (f32 accumulation) ----
        acc = jnp.dot(w_ref[...], col,
                      preferred_element_type=jnp.float32)           # (M*C, HW)
        # folded BN + ReLU; feas is lane-dense and only ~4 vregs at test size,
        # so it stays resident as a value (no scratch, no spills).
        feas = jnp.maximum(acc * scale_ref[...] + shift_ref[...], 0.0)

        # ---- fuse: sum over branches + global average pool -> (C, 1) ----
        fea_U = feas[0:C, :]
        for m in range(1, M):
            fea_U = fea_U + feas[m * C:(m + 1) * C, :]
        fea_s = jnp.sum(fea_U, axis=1, keepdims=True) * inv_hw      # (C, 1)

        # ---- squeeze FC on VPU/XLU (avoid a degenerate 1-row MXU matmul) ----
        fea_z = jnp.sum(fcwT_ref[...] * fea_s, axis=0, keepdims=True) \
            + fcb_ref[...]                                          # (1, d)

        # ---- excite FCs + softmax over branches (per channel) ----
        fcsw = fcsw_ref[...]                                        # (M*C, d)
        fcsb = fcsb_ref[...]                                        # (M*C, 1)
        logits = []
        for m in range(M):
            wm = fcsw[m * C:(m + 1) * C, :]                         # (C, d)
            bm = fcsb[m * C:(m + 1) * C, :]                         # (C, 1)
            logits.append(jnp.sum(wm * fea_z, axis=1, keepdims=True) + bm)
        mx = logits[0]
        for m in range(1, M):
            mx = jnp.maximum(mx, logits[m])
        exs = [jnp.exp(l - mx) for l in logits]
        den = exs[0]
        for m in range(1, M):
            den = den + exs[m]
        inv = pl.reciprocal(den, approx=True)                       # EUP slot

        # ---- attention-weighted sum over branches -> (C, HW) ----
        out = (exs[0] * inv) * feas[0:C, :]
        for m in range(1, M):
            out = out + (exs[m] * inv) * feas[m * C:(m + 1) * C, :]
        out_ref[0] = out

    return kernel


def skconv_forward(x_nchw, w_all, scale, shift, fcwT, fcb, fcsw, fcsb,
                   *, M, KMAX):
    B, C, H, W = x_nchw.shape
    HW = H * W
    d = fcwT.shape[1]
    TC = KMAX * KMAX * C
    TCp = w_all.shape[1]          # tap axis padded to a multiple of 128
    pad = KMAX // 2

    # ---- wrapper-side layout plumbing: spatial zero-pad + im2col (bf16) ----
    x_pad = jnp.pad(x_nchw.astype(jnp.float32),
                    ((0, 0), (0, 0), (pad, pad), (pad, pad)))
    cols = []
    for ky in range(KMAX):
        for kx in range(KMAX):
            cols.append(x_pad[:, :, ky:ky + H, kx:kx + W].reshape(B, C, HW))
    col = jnp.concatenate(cols, axis=1)                    # (B, KMAX^2*C, HW)
    col = jnp.pad(col, ((0, 0), (0, TCp - TC), (0, 0)))    # tile/lane aligned
    col = col.astype(jnp.bfloat16)

    kernel = make_skconv_kernel(C, HW, M)
    out = pl.pallas_call(
        kernel,
        out_shape=jax.ShapeDtypeStruct((B, C, HW), jnp.float32),
        grid_spec=pltpu.PrefetchScalarGridSpec(
            num_scalar_prefetch=0,
            grid=(B,),
            in_specs=[
                pl.BlockSpec((1, TCp, HW), lambda b: (b, 0, 0)),
                pl.BlockSpec((M * C, TCp), lambda b: (0, 0)),
                pl.BlockSpec((M * C, 1), lambda b: (0, 0)),
                pl.BlockSpec((M * C, 1), lambda b: (0, 0)),
                pl.BlockSpec((C, d), lambda b: (0, 0)),
                pl.BlockSpec((1, d), lambda b: (0, 0)),
                pl.BlockSpec((M * C, d), lambda b: (0, 0)),
                pl.BlockSpec((M * C, 1), lambda b: (0, 0)),
            ],
            out_specs=pl.BlockSpec((1, C, HW), lambda b: (b, 0, 0)),
        ),
        compiler_params=pltpu.CompilerParams(
            dimension_semantics=("parallel",),
            vmem_limit_bytes=32 * 1024 * 1024),
    )(col, w_all, scale, shift, fcwT, fcb, fcsw, fcsb)

    return out.reshape(B, C, H, W)        # already NCHW; no transpose needed


def ref_skconv(x_nchw, conv_w, conv_b, gamma, beta, rmean, rvar,
               fc_w, fc_b, fcs_w, fcs_b, *, M, G, eps):
    """Plain-JAX reference mirroring the PyTorch SKConv forward (eval-mode BN)."""
    HIGH = jax.lax.Precision.HIGHEST
    feas = []
    for m in range(M):
        pad = 1 + m
        y = lax.conv_general_dilated(
            x_nchw, conv_w[m], window_strides=(1, 1),
            padding=[(pad, pad), (pad, pad)],
            feature_group_count=G,
            dimension_numbers=('NCHW', 'OIHW', 'NCHW'),
            precision=HIGH)
        y = y + conv_b[m][None, :, None, None]
        sc = gamma[m] / jnp.sqrt(rvar[m] + eps)
        sh = beta[m] - rmean[m] * sc
        y = jnp.maximum(y * sc[None, :, None, None] + sh[None, :, None, None], 0.0)
        feas.append(y)
    feas = jnp.stack(feas, axis=1)                       # (B, M, C, H, W)
    fea_U = feas.sum(axis=1)
    fea_s = fea_U.mean(axis=(2, 3))                      # (B, C)
    fea_z = jnp.dot(fea_s, fc_w.T, precision=HIGH) + fc_b        # (B, d)
    att = jnp.stack(
        [jnp.dot(fea_z, fcs_w[m].T, precision=HIGH) + fcs_b[m] for m in range(M)],
        axis=1)                                          # (B, M, C)
    att = jax.nn.softmax(att, axis=1)
    return (feas * att[:, :, :, None, None]).sum(axis=1)


if __name__ == "__main__":
    # Module hyper-params: features=C, WH=H=W, M branches, G groups, ratio r, L.
    B, C, H, W = 2, 8, 16, 16
    M, G, r, L = 2, 2, 2, 4
    d = max(int(C / r), L)        # = 4
    KMAX = 3 + 2 * (M - 1)        # = 5
    eps = 1e-5

    key = jax.random.PRNGKey(0)
    keys = jax.random.split(key, 6 * M + 5)
    kit = iter(keys)

    Cg = C // G
    conv_w, conv_b = [], []
    gamma, beta, rmean, rvar = [], [], [], []
    for m in range(M):
        K = 3 + 2 * m
        conv_w.append(0.1 * jax.random.normal(next(kit), (C, Cg, K, K), jnp.float32))
        conv_b.append(0.1 * jax.random.normal(next(kit), (C,), jnp.float32))
        gamma.append(1.0 + 0.1 * jax.random.normal(next(kit), (C,), jnp.float32))
        beta.append(0.1 * jax.random.normal(next(kit), (C,), jnp.float32))
        rmean.append(0.1 * jax.random.normal(next(kit), (C,), jnp.float32))
        rvar.append(0.5 + jax.random.uniform(next(kit), (C,), jnp.float32))

    fc_w = 0.2 * jax.random.normal(next(kit), (d, C), jnp.float32)      # Linear(C, d)
    fc_b = 0.1 * jax.random.normal(next(kit), (d,), jnp.float32)
    fcs_w = 0.2 * jax.random.normal(next(kit), (M, C, d), jnp.float32)  # M x Linear(d, C)
    fcs_b = 0.1 * jax.random.normal(next(kit), (M, C), jnp.float32)

    x = jax.random.normal(next(kit), (B, C, H, W), jnp.float32)

    # ---- pack parameters for the kernel ----
    # Fused conv weight: w_all[m*C + cout, (ky*KMAX + kx)*C + cin]; block-
    # diagonal over groups, zero for taps outside branch m's centered KxK
    # window, tap axis zero-padded up to a multiple of 128.
    # NOTE: at realistic C (Cg >= 128) one would keep grouped (Cg) weights and
    # do per-group matmuls instead of this block-diagonal expansion; at
    # C=8 / Cg=4 the expanded matrix is only a few KiB.
    T = KMAX * KMAX
    TC = T * C
    TCp = ((TC + 127) // 128) * 128
    w_all = np.zeros((M * C, TCp), np.float32)
    scale = np.zeros((M * C, 1), np.float32)
    shift = np.zeros((M * C, 1), np.float32)
    for m in range(M):
        K = 3 + 2 * m
        off = (KMAX - K) // 2
        wm = np.asarray(conv_w[m])                       # (C, Cg, K, K)
        for cout in range(C):
            g = cout // Cg
            for i in range(K):
                for j in range(K):
                    t = (off + i) * KMAX + (off + j)
                    w_all[m * C + cout,
                          t * C + g * Cg: t * C + (g + 1) * Cg] = wm[cout, :, i, j]
        sc = np.asarray(gamma[m]) / np.sqrt(np.asarray(rvar[m]) + eps)
        scale[m * C:(m + 1) * C, 0] = sc
        shift[m * C:(m + 1) * C, 0] = (np.asarray(beta[m])
                                       + sc * (np.asarray(conv_b[m]) - np.asarray(rmean[m])))
    # TODO(synk): BatchNorm2d is folded in eval mode (running statistics);
    # training-mode batch-statistics BN is not implemented in the kernel.

    w_all_k = jnp.asarray(w_all, dtype=jnp.bfloat16)            # (M*C, TCp)
    scale_k = jnp.asarray(scale)                                # (M*C, 1)
    shift_k = jnp.asarray(shift)                                # (M*C, 1)
    fcwT_k = jnp.asarray(fc_w).T                                # (C, d)
    fcb_k = jnp.asarray(fc_b).reshape(1, d)                     # (1, d)
    fcsw_k = jnp.asarray(fcs_w).reshape(M * C, d)               # (M*C, d)
    fcsb_k = jnp.asarray(fcs_b).reshape(M * C, 1)               # (M*C, 1)

    fwd = jax.jit(functools.partial(skconv_forward, M=M, KMAX=KMAX))
    out = fwd(x, w_all_k, scale_k, shift_k, fcwT_k, fcb_k, fcsw_k, fcsb_k)
    out = jax.block_until_ready(out)

    ref = ref_skconv(x, conv_w, conv_b, gamma, beta, rmean, rvar,
                     fc_w, fc_b, fcs_w, fcs_b, M=M, G=G, eps=eps)
    # Tolerance re-validated for bf16 conv inputs (f32 MXU accumulation) vs.
    # the full-f32 HIGHEST-precision reference.
    np.testing.assert_allclose(np.asarray(out), np.asarray(ref),
                               rtol=2e-2, atol=2e-2)
    print("KERNEL_OK")
</pallas_src>

<mosaic_0001>
module attributes {stable_mosaic.version = 11 : i64} {
  func.func @kernel(%arg0: i32, %arg1: memref<1x256x256xbf16, #tpu.memory_space<vmem>>, %arg2: memref<16x256xbf16, #tpu.memory_space<vmem>>, %arg3: memref<16x1xf32, #tpu.memory_space<vmem>>, %arg4: memref<16x1xf32, #tpu.memory_space<vmem>>, %arg5: memref<8x4xf32, #tpu.memory_space<vmem>>, %arg6: memref<1x4xf32, #tpu.memory_space<vmem>>, %arg7: memref<16x4xf32, #tpu.memory_space<vmem>>, %arg8: memref<16x1xf32, #tpu.memory_space<vmem>>, %arg9: memref<1x8x256xf32, #tpu.memory_space<vmem>>) attributes {dimension_semantics = [#tpu.dimension_semantics<parallel>], iteration_bounds = array<i64: 2>, scalar_prefetch = 0 : i64, scratch_operands = 0 : i64, tpu.core_type = #tpu.core_type<tc>, window_params = [{transform_indices = @transform_0, window_bounds = array<i64: 1, 256, 256>}, {pipeline_mode = #tpu.pipeline_mode<synchronous>, transform_indices = @transform_1, window_bounds = array<i64: 16, 256>}, {pipeline_mode = #tpu.pipeline_mode<synchronous>, transform_indices = @transform_2, window_bounds = array<i64: 16, 1>}, {pipeline_mode = #tpu.pipeline_mode<synchronous>, transform_indices = @transform_3, window_bounds = array<i64: 16, 1>}, {pipeline_mode = #tpu.pipeline_mode<synchronous>, transform_indices = @transform_4, window_bounds = array<i64: 8, 4>}, {pipeline_mode = #tpu.pipeline_mode<synchronous>, transform_indices = @transform_5, window_bounds = array<i64: 1, 4>}, {pipeline_mode = #tpu.pipeline_mode<synchronous>, transform_indices = @transform_6, window_bounds = array<i64: 16, 4>}, {pipeline_mode = #tpu.pipeline_mode<synchronous>, transform_indices = @transform_7, window_bounds = array<i64: 16, 1>}, {transform_indices = @transform_8, window_bounds = array<i64: 1, 8, 256>}]} {
    %c0 = arith.constant 0 : index
    %c0_0 = arith.constant 0 : index
    %c0_1 = arith.constant 0 : index
    %0 = vector.load %arg1[%c0, %c0_0, %c0_1] : memref<1x256x256xbf16, #tpu.memory_space<vmem>>, vector<1x256x256xbf16>
    %1 = vector.shape_cast %0 : vector<1x256x256xbf16> to vector<256x256xbf16>
    %c0_2 = arith.constant 0 : index
    %c0_3 = arith.constant 0 : index
    %2 = vector.load %arg2[%c0_2, %c0_3] : memref<16x256xbf16, #tpu.memory_space<vmem>>, vector<16x256xbf16>
    %cst = arith.constant dense<0.000000e+00> : vector<16x256xf32>
    %3 = tpu.matmul %2, %1, %cst {dimension_numbers = #tpu.dot_dimension_numbers<[1], [0], [0], [1], [0, 0, 1, 1], [], []>} : vector<16x256xbf16>, vector<256x256xbf16>, vector<16x256xf32> -> vector<16x256xf32>
    %c0_4 = arith.constant 0 : index
    %c0_5 = arith.constant 0 : index
    %4 = vector.load %arg3[%c0_4, %c0_5] : memref<16x1xf32, #tpu.memory_space<vmem>>, vector<16x1xf32>
    %5 = vector.broadcast %4 : vector<16x1xf32> to vector<16x256xf32>
    %6 = arith.mulf %3, %5 : vector<16x256xf32>
    %c0_6 = arith.constant 0 : index
    %c0_7 = arith.constant 0 : index
    %7 = vector.load %arg4[%c0_6, %c0_7] : memref<16x1xf32, #tpu.memory_space<vmem>>, vector<16x1xf32>
    %8 = vector.broadcast %7 : vector<16x1xf32> to vector<16x256xf32>
    %9 = arith.addf %6, %8 : vector<16x256xf32>
    %cst_8 = arith.constant 0.000000e+00 : f32
    %10 = vector.broadcast %cst_8 : f32 to vector<16x256xf32>
    %11 = arith.maximumf %9, %10 : vector<16x256xf32>
    %12 = vector.extract_strided_slice %11 {offsets = [0, 0], sizes = [8, 256], strides = [1, 1]} : vector<16x256xf32> to vector<8x256xf32>
    %13 = vector.extract_strided_slice %11 {offsets = [8, 0], sizes = [8, 256], strides = [1, 1]} : vector<16x256xf32> to vector<8x256xf32>
    %14 = arith.addf %12, %13 : vector<8x256xf32>
    %cst_9 = arith.constant dense<0.000000e+00> : vector<8xf32>
    %15 = vector.multi_reduction <add>, %14, %cst_9 [1] : vector<8x256xf32> to vector<8xf32>
    %16 = vector.shape_cast %15 : vector<8xf32> to vector<8x1xf32>
    %cst_10 = arith.constant 3.906250e-03 : f32
    %17 = vector.broadcast %cst_10 : f32 to vector<8x1xf32>
    %18 = arith.mulf %16, %17 : vector<8x1xf32>
    %c0_11 = arith.constant 0 : index
    %c0_12 = arith.constant 0 : index
    %19 = vector.load %arg5[%c0_11, %c0_12] : memref<8x4xf32, #tpu.memory_space<vmem>>, vector<8x4xf32>
    %20 = vector.broadcast %18 : vector<8x1xf32> to vector<8x4xf32>
    %21 = arith.mulf %19, %20 : vector<8x4xf32>
    %cst_13 = arith.constant dense<0.000000e+00> : vector<4xf32>
    %22 = vector.multi_reduction <add>, %21, %cst_13 [0] : vector<8x4xf32> to vector<4xf32>
    %23 = vector.shape_cast %22 : vector<4xf32> to vector<1x4xf32>
    %c0_14 = arith.constant 0 : index
    %c0_15 = arith.constant 0 : index
    %24 = vector.load %arg6[%c0_14, %c0_15] : memref<1x4xf32, #tpu.memory_space<vmem>>, vector<1x4xf32>
    %25 = arith.addf %23, %24 : vector<1x4xf32>
    %c0_16 = arith.constant 0 : index
    %c0_17 = arith.constant 0 : index
    %26 = vector.load %arg7[%c0_16, %c0_17] : memref<16x4xf32, #tpu.memory_space<vmem>>, vector<16x4xf32>
    %c0_18 = arith.constant 0 : index
    %c0_19 = arith.constant 0 : index
    %27 = vector.load %arg8[%c0_18, %c0_19] : memref<16x1xf32, #tpu.memory_space<vmem>>, vector<16x1xf32>
    %28 = vector.extract_strided_slice %26 {offsets = [0, 0], sizes = [8, 4], strides = [1, 1]} : vector<16x4xf32> to vector<8x4xf32>
    %29 = vector.extract_strided_slice %27 {offsets = [0, 0], sizes = [8, 1], strides = [1, 1]} : vector<16x1xf32> to vector<8x1xf32>
    %30 = vector.broadcast %25 : vector<1x4xf32> to vector<8x4xf32>
    %31 = arith.mulf %28, %30 : vector<8x4xf32>
    %cst_20 = arith.constant dense<0.000000e+00> : vector<8xf32>
    %32 = vector.multi_reduction <add>, %31, %cst_20 [1] : vector<8x4xf32> to vector<8xf32>
    %33 = vector.shape_cast %32 : vector<8xf32> to vector<8x1xf32>
    %34 = arith.addf %33, %29 : vector<8x1xf32>
    %35 = vector.extract_strided_slice %26 {offsets = [8, 0], sizes = [8, 4], strides = [1, 1]} : vector<16x4xf32> to vector<8x4xf32>
    %36 = vector.extract_strided_slice %27 {offsets = [8, 0], sizes = [8, 1], strides = [1, 1]} : vector<16x1xf32> to vector<8x1xf32>
    %37 = vector.broadcast %25 : vector<1x4xf32> to vector<8x4xf32>
    %38 = arith.mulf %35, %37 : vector<8x4xf32>
    %cst_21 = arith.constant dense<0.000000e+00> : vector<8xf32>
    %39 = vector.multi_reduction <add>, %38, %cst_21 [1] : vector<8x4xf32> to vector<8xf32>
    %40 = vector.shape_cast %39 : vector<8xf32> to vector<8x1xf32>
    %41 = arith.addf %40, %36 : vector<8x1xf32>
    %42 = arith.maximumf %34, %41 : vector<8x1xf32>
    %43 = arith.subf %34, %42 : vector<8x1xf32>
    %44 = math.exp %43 : vector<8x1xf32>
    %45 = arith.subf %41, %42 : vector<8x1xf32>
    %46 = math.exp %45 : vector<8x1xf32>
    %47 = arith.addf %44, %46 : vector<8x1xf32>
    %48 = tpu.reciprocal %47 {approx = true} : vector<8x1xf32> -> vector<8x1xf32>
    %49 = arith.mulf %44, %48 : vector<8x1xf32>
    %50 = vector.extract_strided_slice %11 {offsets = [0, 0], sizes = [8, 256], strides = [1, 1]} : vector<16x256xf32> to vector<8x256xf32>
    %51 = vector.broadcast %49 : vector<8x1xf32> to vector<8x256xf32>
    %52 = arith.mulf %51, %50 : vector<8x256xf32>
    %53 = arith.mulf %46, %48 : vector<8x1xf32>
    %54 = vector.extract_strided_slice %11 {offsets = [8, 0], sizes = [8, 256], strides = [1, 1]} : vector<16x256xf32> to vector<8x256xf32>
    %55 = vector.broadcast %53 : vector<8x1xf32> to vector<8x256xf32>
    %56 = arith.mulf %55, %54 : vector<8x256xf32>
    %57 = arith.addf %52, %56 : vector<8x256xf32>
    %c0_22 = arith.constant 0 : index
    %c0_23 = arith.constant 0 : index
    %c0_24 = arith.constant 0 : index
    %58 = vector.load %arg9[%c0_22, %c0_23, %c0_24] : memref<1x8x256xf32, #tpu.memory_space<vmem>>, vector<1x8x256xf32>
    %59 = vector.shape_cast %58 : vector<1x8x256xf32> to vector<8x256xf32>
    %60 = vector.shape_cast %57 : vector<8x256xf32> to vector<1x8x256xf32>
    tpu.vector_store %arg9[%c0_22, %c0_23, %c0_24], %60 {strides = array<i32>} : memref<1x8x256xf32, #tpu.memory_space<vmem>>, vector<1x8x256xf32>,
    return
  }
  func.func @transform_0(%arg0: i32) -> (i32, i32, i32) {
    %c0_i32 = arith.constant 0 : i32
    %c0_i32_0 = arith.constant 0 : i32
    %c0_i32_1 = arith.constant 0 : i32
    return %arg0, %c0_i32, %c0_i32_0 : i32, i32, i32
  }
  func.func @transform_1(%arg0: i32) -> (i32, i32) {
    %c0_i32 = arith.constant 0 : i32
    %c0_i32_0 = arith.constant 0 : i32
    %c0_i32_1 = arith.constant 0 : i32
    return %c0_i32, %c0_i32_0 : i32, i32
  }
  func.func @transform_2(%arg0: i32) -> (i32, i32) {
    %c0_i32 = arith.constant 0 : i32
    %c0_i32_0 = arith.constant 0 : i32
    %c0_i32_1 = arith.constant 0 : i32
    return %c0_i32, %c0_i32_0 : i32, i32
  }
  func.func @transform_3(%arg0: i32) -> (i32, i32) {
    %c0_i32 = arith.constant 0 : i32
    %c0_i32_0 = arith.constant 0 : i32
    %c0_i32_1 = arith.constant 0 : i32
    return %c0_i32, %c0_i32_0 : i32, i32
  }
  func.func @transform_4(%arg0: i32) -> (i32, i32) {
    %c0_i32 = arith.constant 0 : i32
    %c0_i32_0 = arith.constant 0 : i32
    %c0_i32_1 = arith.constant 0 : i32
    return %c0_i32, %c0_i32_0 : i32, i32
  }
  func.func @transform_5(%arg0: i32) -> (i32, i32) {
    %c0_i32 = arith.constant 0 : i32
    %c0_i32_0 = arith.constant 0 : i32
    %c0_i32_1 = arith.constant 0 : i32
    return %c0_i32, %c0_i32_0 : i32, i32
  }
  func.func @transform_6(%arg0: i32) -> (i32, i32) {
    %c0_i32 = arith.constant 0 : i32
    %c0_i32_0 = arith.constant 0 : i32
    %c0_i32_1 = arith.constant 0 : i32
    return %c0_i32, %c0_i32_0 : i32, i32
  }
  func.func @transform_7(%arg0: i32) -> (i32, i32) {
    %c0_i32 = arith.constant 0 : i32
    %c0_i32_0 = arith.constant 0 : i32
    %c0_i32_1 = arith.constant 0 : i32
    return %c0_i32, %c0_i32_0 : i32, i32
  }
  func.func @transform_8(%arg0: i32) -> (i32, i32, i32) {
    %c0_i32 = arith.constant 0 : i32
    %c0_i32_0 = arith.constant 0 : i32
    %c0_i32_1 = arith.constant 0 : i32
    return %arg0, %c0_i32, %c0_i32_0 : i32, i32, i32
  }
}

</mosaic_0001>

<llo_original>
// kernel: skconv_forward.1
$region0: #{skconv_forward.1}
  #allocation0 [shape = 'u32[]', space=smem, size = 0x4, offset = 0x4, fixed_abs, tag = 'smem constant byte address 0x4 - core index']
  #allocation1 [shape = 'u32[72,128]{1,0:T(1,128)}', space=vmem, size = 0x9000, scoped, tag = 'internal scratch']
  %s0 = inlined_call_operand.vmem [shape: bf16[2,256,256], index: 0, kind: input, shape index: {}]
  %s1 = inlined_call_operand.vmem [shape: bf16[16,256], index: 1, kind: input, shape index: {}]
  %s2 = inlined_call_operand.vmem [shape: f32[16,1], index: 2, kind: input, shape index: {}]
  %s3 = inlined_call_operand.vmem [shape: f32[16,1], index: 3, kind: input, shape index: {}]
  %s4 = inlined_call_operand.vmem [shape: f32[8,4], index: 4, kind: input, shape index: {}]
  %s5 = inlined_call_operand.vmem [shape: f32[1,4], index: 5, kind: input, shape index: {}]
  %s6 = inlined_call_operand.vmem [shape: f32[16,4], index: 6, kind: input, shape index: {}]
  %s7 = inlined_call_operand.vmem [shape: f32[16,1], index: 7, kind: input, shape index: {}]
  %s8 = inlined_call_operand.vmem [shape: f32[2,8,256], index: 8, kind: output, shape index: {}]
  %s9 = sld [smem:[#allocation0]]
  $region65: #{skconv_forward.1} parent=0
    _
  %s11 = ssub.s32 1, %s9
  %s12 = scalar_select 0, %s11, %s9
  loop: start=0, step=1, limit=4
  $region2: #{skconv_forward.1} parent=0 // loop_pre_header
    _
  $region3: #{skconv_forward.1} parent=0 // loop_header
    %s14 = sphi 0, %s18
    %p15 = scmp.ge.s32.totalorder %s14, 4
    %s24 = sphi 0, %s26
    %s27 = sphi 0, %s24
    %s28 = sphi 0, %s27
    %s44 = sphi 0, %s28
    %s48 = sphi 0, %s48
    %s50 = sphi 0, %s48
    %s51 = sphi 0, %s50
    %s65 = sphi 0, %s51
    %s69 = sphi 0, %s69
    %s71 = sphi 0, %s69
    %s72 = sphi 0, %s71
    %s86 = sphi 0, %s72
    %s90 = sphi 0, %s90
    %s92 = sphi 0, %s90
    %s93 = sphi 0, %s92
    %s107 = sphi 0, %s93
    %s111 = sphi 0, %s111
    %s113 = sphi 0, %s111
    %s114 = sphi 0, %s113
    %s128 = sphi 0, %s114
    %s132 = sphi 0, %s132
    %s134 = sphi 0, %s132
    %s135 = sphi 0, %s134
    %s149 = sphi 0, %s135
    %s153 = sphi 0, %s153
    %s155 = sphi 0, %s153
    %s156 = sphi 0, %s155
    %s170 = sphi 0, %s156
    %s174 = sphi 0, %s174
    %s176 = sphi 0, %s174
    %s177 = sphi 0, %s176
    %s191 = sphi 0, %s177
    %s197 = sphi 0, %s199
    %s200 = sphi 0, %s197
    %s201 = sphi 0, %s200
    %s217 = sphi 0, %s201
  $region4: #{skconv_forward.1} parent=0 // loop_header_branch
    %17 = sbr.rel (%p15) target = $region8
  $region5: #{skconv_forward.1} parent=0 // loop_body
    %s19 = ssub.s32 %s14, 1
    %s20 = ssub.s32 %s14, 2
    %s21 = sadd.s32 %s14, 1
    %s22 = ssub.s32 %s14, %s21
    %p23 = scmp.eq.s32.totalorder %s22, 0
    %s25 = sadd.s32 %s24, 1
    %s26 = scalar_select %p23, %s24, %s25
    %p29 = pneg %p23
    %p30 = scmp.eq.s32.totalorder %s14, 1
    %p31 = por %p29, %p30
    %p32 = scmp.ne.s32.totalorder %s24, %s27
    %p33 = scmp.eq.s32.totalorder %s14, 0
    %p34 = por %p32, %p33
    %p35 = scmp.ne.s32.totalorder %s24, %s27
    %p36 = scmp.eq.s32.totalorder %s19, 1
    %p37 = por %p35, %p36
    %p38 = scmp.ne.s32.totalorder %s27, %s28
    %p39 = scmp.eq.s32.totalorder %s19, 0
    %p40 = por %p38, %p39
    %p41 = scmp.ne.s32.totalorder %s27, %s28
    %p42 = scmp.eq.s32.totalorder %s20, 1
    %p43 = por %p41, %p42
    %p45 = scmp.ne.s32.totalorder %s28, %s44
    %p46 = scmp.eq.s32.totalorder %s20, 0
    %p47 = por %p45, %p46
    %s49 = sadd.s32 %s48, 1
    %p52 = scmp.eq.s32.totalorder %s14, 1
    %p53 = scmp.ne.s32.totalorder %s48, %s50
    %p54 = scmp.eq.s32.totalorder %s14, 0
    %p55 = por %p53, %p54
    %p56 = scmp.ne.s32.totalorder %s48, %s50
    %p57 = scmp.eq.s32.totalorder %s19, 1
    %p58 = por %p56, %p57
    %p59 = scmp.ne.s32.totalorder %s50, %s51
    %p60 = scmp.eq.s32.totalorder %s19, 0
    %p61 = por %p59, %p60
    %p62 = scmp.ne.s32.totalorder %s50, %s51
    %p63 = scmp.eq.s32.totalorder %s20, 1
    %p64 = por %p62, %p63
    %p66 = scmp.ne.s32.totalorder %s51, %s65
    %p67 = scmp.eq.s32.totalorder %s20, 0
    %p68 = por %p66, %p67
    %s70 = sadd.s32 %s69, 1
    %p73 = scmp.eq.s32.totalorder %s14, 1
    %p74 = scmp.ne.s32.totalorder %s69, %s71
    %p75 = scmp.eq.s32.totalorder %s14, 0
    %p76 = por %p74, %p75
    %p77 = scmp.ne.s32.totalorder %s69, %s71
    %p78 = scmp.eq.s32.totalorder %s19, 1
    %p79 = por %p77, %p78
    %p80 = scmp.ne.s32.totalorder %s71, %s72
    %p81 = scmp.eq.s32.totalorder %s19, 0
    %p82 = por %p80, %p81
    %p83 = scmp.ne.s32.totalorder %s71, %s72
    %p84 = scmp.eq.s32.totalorder %s20, 1
    %p85 = por %p83, %p84
    %p87 = scmp.ne.s32.totalorder %s72, %s86
    %p88 = scmp.eq.s32.totalorder %s20, 0
    %p89 = por %p87, %p88
    %s91 = sadd.s32 %s90, 1
    %p94 = scmp.eq.s32.totalorder %s14, 1
    %p95 = scmp.ne.s32.totalorder %s90, %s92
    %p96 = scmp.eq.s32.totalorder %s14, 0
    %p97 = por %p95, %p96
    %p98 = scmp.ne.s32.totalorder %s90, %s92
    %p99 = scmp.eq.s32.totalorder %s19, 1
    %p100 = por %p98, %p99
    %p101 = scmp.ne.s32.totalorder %s92, %s93
    %p102 = scmp.eq.s32.totalorder %s19, 0
    %p103 = por %p101, %p102
    %p104 = scmp.ne.s32.totalorder %s92, %s93
    %p105 = scmp.eq.s32.totalorder %s20, 1
    %p106 = por %p104, %p105
    %p108 = scmp.ne.s32.totalorder %s93, %s107
    %p109 = scmp.eq.s32.totalorder %s20, 0
    %p110 = por %p108, %p109
    %s112 = sadd.s32 %s111, 1
    %p115 = scmp.eq.s32.totalorder %s14, 1
    %p116 = scmp.ne.s32.totalorder %s111, %s113
    %p117 = scmp.eq.s32.totalorder %s14, 0
    %p118 = por %p116, %p117
    %p119 = scmp.ne.s32.totalorder %s111, %s113
    %p120 = scmp.eq.s32.totalorder %s19, 1
    %p121 = por %p119, %p120
    %p122 = scmp.ne.s32.totalorder %s113, %s114
    %p123 = scmp.eq.s32.totalorder %s19, 0
    %p124 = por %p122, %p123
    %p125 = scmp.ne.s32.totalorder %s113, %s114
    %p126 = scmp.eq.s32.totalorder %s20, 1
    %p127 = por %p125, %p126
    %p129 = scmp.ne.s32.totalorder %s114, %s128
    %p130 = scmp.eq.s32.totalorder %s20, 0
    %p131 = por %p129, %p130
    %s133 = sadd.s32 %s132, 1
    %p136 = scmp.eq.s32.totalorder %s14, 1
    %p137 = scmp.ne.s32.totalorder %s132, %s134
    %p138 = scmp.eq.s32.totalorder %s14, 0
    %p139 = por %p137, %p138
    %p140 = scmp.ne.s32.totalorder %s132, %s134
    %p141 = scmp.eq.s32.totalorder %s19, 1
    %p142 = por %p140, %p141
    %p143 = scmp.ne.s32.totalorder %s134, %s135
    %p144 = scmp.eq.s32.totalorder %s19, 0
    %p145 = por %p143, %p144
    %p146 = scmp.ne.s32.totalorder %s134, %s135
    %p147 = scmp.eq.s32.totalorder %s20, 1
    %p148 = por %p146, %p147
    %p150 = scmp.ne.s32.totalorder %s135, %s149
    %p151 = scmp.eq.s32.totalorder %s20, 0
    %p152 = por %p150, %p151
    %s154 = sadd.s32 %s153, 1
    %p157 = scmp.eq.s32.totalorder %s14, 1
    %p158 = scmp.ne.s32.totalorder %s153, %s155
    %p159 = scmp.eq.s32.totalorder %s14, 0
    %p160 = por %p158, %p159
    %p161 = scmp.ne.s32.totalorder %s153, %s155
    %p162 = scmp.eq.s32.totalorder %s19, 1
    %p163 = por %p161, %p162
    %p164 = scmp.ne.s32.totalorder %s155, %s156
    %p165 = scmp.eq.s32.totalorder %s19, 0
    %p166 = por %p164, %p165
    %p167 = scmp.ne.s32.totalorder %s155, %s156
    %p168 = scmp.eq.s32.totalorder %s20, 1
    %p169 = por %p167, %p168
    %p171 = scmp.ne.s32.totalorder %s156, %s170
    %p172 = scmp.eq.s32.totalorder %s20, 0
    %p173 = por %p171, %p172
    %s175 = sadd.s32 %s174, 1
    %p178 = scmp.eq.s32.totalorder %s14, 1
    %p179 = scmp.ne.s32.totalorder %s174, %s176
    %p180 = scmp.eq.s32.totalorder %s14, 0
    %p181 = por %p179, %p180
    %p182 = scmp.ne.s32.totalorder %s174, %s176
    %p183 = scmp.eq.s32.totalorder %s19, 1
    %p184 = por %p182, %p183
    %p185 = scmp.ne.s32.totalorder %s176, %s177
    %p186 = scmp.eq.s32.totalorder %s19, 0
    %p187 = por %p185, %p186
    %p188 = scmp.ne.s32.totalorder %s176, %s177
    %p189 = scmp.eq.s32.totalorder %s20, 1
    %p190 = por %p188, %p189
    %p192 = scmp.ne.s32.totalorder %s177, %s191
    %p193 = scmp.eq.s32.totalorder %s20, 0
    %p194 = por %p192, %p193
    %s195 = ssub.s32 %s14, %s21
    %p196 = scmp.eq.s32.totalorder %s195, 0
    %s198 = sadd.s32 %s197, 1
    %s199 = scalar_select %p196, %s197, %s198
    %p202 = pneg %p196
    %p203 = scmp.eq.s32.totalorder %s14, 1
    %p204 = por %p202, %p203
    %p205 = scmp.ne.s32.totalorder %s197, %s200
    %p206 = scmp.eq.s32.totalorder %s14, 0
    %p207 = por %p205, %p206
    %p208 = scmp.ne.s32.totalorder %s197, %s200
    %p209 = scmp.eq.s32.totalorder %s19, 1
    %p210 = por %p208, %p209
    %p211 = scmp.ne.s32.totalorder %s200, %s201
    %p212 = scmp.eq.s32.totalorder %s19, 0
    %p213 = por %p211, %p212
    %p214 = scmp.ne.s32.totalorder %s200, %s201
    %p215 = scmp.eq.s32.totalorder %s20, 1
    %p216 = por %p214, %p215
    %p218 = scmp.ne.s32.totalorder %s201, %s217
    %p219 = scmp.eq.s32.totalorder %s20, 0
    %p220 = por %p218, %p219
    %p221 = scmp.le.s32.totalorder 1, %s14
    %p222 = scmp.lt.s32.totalorder %s14, 3
    %p223 = pnand %p221, %p222
    %p224 = pneg %p223
    // Predicated region
    $region9: #{skconv_forward.1} parent=5 // pred_check
      _
    $region10: #{skconv_forward.1} parent=5 // pred_check_branch
      %226 = sbr.rel (%p223) target = $region12
    $region11: #{skconv_forward.1} parent=5 // pred_region
      %s227 = ssub.s32 %s14, 1
      // Predicated region
      $region13: #{skconv_forward.1} parent=11 // pred_check
        %p228 = pneg %p61
      $region14: #{skconv_forward.1} parent=11 // pred_check_branch
        %230 = sbr.rel (%p228) target = $region16
      $region15: #{skconv_forward.1} parent=11 // pred_region
        _
      $region16: #{skconv_forward.1} parent=11 // pred_fallthru
        _
      // Predicated region
      $region17: #{skconv_forward.1} parent=11 // pred_check
        %p231 = pneg %p82
      $region18: #{skconv_forward.1} parent=11 // pred_check_branch
        %233 = sbr.rel (%p231) target = $region20
      $region19: #{skconv_forward.1} parent=11 // pred_region
        _
      $region20: #{skconv_forward.1} parent=11 // pred_fallthru
        _
      // Predicated region
      $region21: #{skconv_forward.1} parent=11 // pred_check
        %p234 = pneg %p103
      $region22: #{skconv_forward.1} parent=11 // pred_check_branch
        %236 = sbr.rel (%p234) target = $region24
      $region23: #{skconv_forward.1} parent=11 // pred_region
        _
      $region24: #{skconv_forward.1} parent=11 // pred_fallthru
        _
      // Predicated region
      $region25: #{skconv_forward.1} parent=11 // pred_check
        %p237 = pneg %p124
      $region26: #{skconv_forward.1} parent=11 // pred_check_branch
        %239 = sbr.rel (%p237) target = $region28
      $region27: #{skconv_forward.1} parent=11 // pred_region
        _
      $region28: #{skconv_forward.1} parent=11 // pred_fallthru
        _
      // Predicated region
      $region29: #{skconv_forward.1} parent=11 // pred_check
        %p240 = pneg %p145
      $region30: #{skconv_forward.1} parent=11 // pred_check_branch
        %242 = sbr.rel (%p240) target = $region32
      $region31: #{skconv_forward.1} parent=11 // pred_region
        _
      $region32: #{skconv_forward.1} parent=11 // pred_fallthru
        _
      // Predicated region
      $region33: #{skconv_forward.1} parent=11 // pred_check
        %p243 = pneg %p166
      $region34: #{skconv_forward.1} parent=11 // pred_check_branch
        %245 = sbr.rel (%p243) target = $region36
      $region35: #{skconv_forward.1} parent=11 // pred_region
        _
      $region36: #{skconv_forward.1} parent=11 // pred_fallthru
        _
      // Predicated region
      $region37: #{skconv_forward.1} parent=11 // pred_check
        %p246 = pneg %p187
      $region38: #{skconv_forward.1} parent=11 // pred_check_branch
        %248 = sbr.rel (%p246) target = $region40
      $region39: #{skconv_forward.1} parent=11 // pred_region
        _
      $region40: #{skconv_forward.1} parent=11 // pred_fallthru
        _
    $region12: #{skconv_forward.1} parent=5 // pred_fallthru
      _
    %p249 = scmp.lt.s32.totalorder %s14, 2
    // Predicated region
    $region41: #{skconv_forward.1} parent=5 // pred_check
      %p250 = pneg %p249
    $region42: #{skconv_forward.1} parent=5 // pred_check_branch
      %252 = sbr.rel (%p250) target = $region44
    $region43: #{skconv_forward.1} parent=5 // pred_region
      // Predicated region
      $region45: #{skconv_forward.1} parent=43 // pred_check
        %p253 = pneg %p34
      $region46: #{skconv_forward.1} parent=43 // pred_check_branch
        %255 = sbr.rel (%p253) target = $region48
      $region47: #{skconv_forward.1} parent=43 // pred_region
        %p256 = scmp.lt.s32.totalorder %s14, 1
        %s257 = scalar_select %p256, %s14, 1
        %s258 = smul.addr %s257, 64
        %s259 = smul.addr %s258, 4
        %s260 = scalar_lea.vmem %s0, %s259
      $region48: #{skconv_forward.1} parent=43 // pred_fallthru
        _
    $region44: #{skconv_forward.1} parent=5 // pred_fallthru
      _
    %p261 = scmp.le.s32.totalorder 1, %s14
    %p262 = scmp.lt.s32.totalorder %s14, 3
    %p263 = pnand %p261, %p262
    %p264 = pneg %p263
    // Predicated region
    $region49: #{skconv_forward.1} parent=5 // pred_check
      _
    $region50: #{skconv_forward.1} parent=5 // pred_check_branch
      %266 = sbr.rel (%p263) target = $region52
    $region51: #{skconv_forward.1} parent=5 // pred_region
      %s267 = ssub.s32 %s14, 1
      %p268 = scmp.lt.s32.totalorder %s19, 1
      %s269 = scalar_select %p268, %s19, 1
      %s270 = smul.addr %s269, 64
      %s271 = smul.addr %s270, 4
      %s272 = scalar_lea.vmem %s0, %s271
      %p273 = pneg %p40
      %p274 = pneg %p37
      %p275 = pneg %p61
      %p276 = pneg %p58
      %p277 = pneg %p82
      %p278 = pneg %p79
      %p279 = pneg %p103
      %p280 = pneg %p100
      %p281 = pneg %p124
      %p282 = pneg %p121
      %p283 = pneg %p145
      %p284 = pneg %p142
      %p285 = pneg %p166
      %p286 = pneg %p163
      %p287 = pneg %p187
      %p288 = pneg %p184
      %p289 = pneg %p213
      %p290 = pneg %p210
      %p291 = scmp.lt.s32.totalorder %s19, 1
      %s292 = scalar_select %p291, %s19, 1
      %s293 = smul.addr %s292, 2
      %s294 = smul.addr %s293, 8
      %s295 = scalar_lea.vmem %s8, %s294
      %p296 = scmp.lt.s32.totalorder %s19, 1
      %s297 = scalar_select %p296, %s19, 1
      %s298 = smul.addr %s297, 64
      %s299 = smul.addr %s298, 4
      %s300 = scalar_lea.vmem %s0, %s299
      %p301 = scmp.lt.s32.totalorder %s19, 1
      %s302 = scalar_select %p301, %s19, 1
      %s303 = smul.addr %s302, 2
      %s304 = smul.addr %s303, 8
      %s305 = scalar_lea.vmem %s8, %s304
      %v306 = vld [vmem:[%s300] sm:$0xff]
      %v307 = vld [vmem:[%s300 + $0x8] sm:$0xff]
      %v308 = vld [vmem:[%s300 + $0x10] sm:$0xff]
      %v309 = vld [vmem:[%s300 + $0x18] sm:$0xff]
      %v310 = vld [vmem:[%s300 + $0x20] sm:$0xff]
      %v311 = vld [vmem:[%s300 + $0x28] sm:$0xff]
      %v312 = vld [vmem:[%s300 + $0x30] sm:$0xff]
      %v313 = vld [vmem:[%s300 + $0x38] sm:$0xff]
      %v314 = vld [vmem:[%s300 + $0x40] sm:$0xff]
      %v315 = vld [vmem:[%s300 + $0x48] sm:$0xff]
      %v316 = vld [vmem:[%s300 + $0x50] sm:$0xff]
      %v317 = vld [vmem:[%s300 + $0x58] sm:$0xff]
      %v318 = vld [vmem:[%s300 + $0x60] sm:$0xff]
      %v319 = vld [vmem:[%s300 + $0x68] sm:$0xff]
      %v320 = vld [vmem:[%s300 + $0x70] sm:$0xff]
      %v321 = vld [vmem:[%s300 + $0x78] sm:$0xff]
      %v322 = vld [vmem:[%s300 + $0x80] sm:$0xff]
      %v323 = vld [vmem:[%s300 + $0x88] sm:$0xff]
      %v324 = vld [vmem:[%s300 + $0x90] sm:$0xff]
      %v325 = vld [vmem:[%s300 + $0x98] sm:$0xff]
      %v326 = vld [vmem:[%s300 + $0xa0] sm:$0xff]
      %v327 = vld [vmem:[%s300 + $0xa8] sm:$0xff]
      %v328 = vld [vmem:[%s300 + $0xb0] sm:$0xff]
      %v329 = vld [vmem:[%s300 + $0xb8] sm:$0xff]
      %v330 = vld [vmem:[%s300 + $0xc0] sm:$0xff]
      %v331 = vld [vmem:[%s300 + $0xc8] sm:$0xff]
      %v332 = vld [vmem:[%s300 + $0xd0] sm:$0xff]
      %v333 = vld [vmem:[%s300 + $0xd8] sm:$0xff]
      %v334 = vld [vmem:[%s300 + $0xe0] sm:$0xff]
      %v335 = vld [vmem:[%s300 + $0xe8] sm:$0xff]
      %v336 = vld [vmem:[%s300 + $0xf0] sm:$0xff]
      %v337 = vld [vmem:[%s300 + $0xf8] sm:$0xff]
      %v338 = vld [vmem:[%s1] sm:$0xff]
      %v339 = vld [vmem:[%s1 + $0x8] sm:$0xff]
      %v342 = vunpack.c.l.b16 %v338
      %v343 = vunpack.c.h.b16 %v338
      %v344 = vunpack.c.l.b16 %v339
      %v345 = vunpack.c.h.b16 %v339
      %v346 = vpack.c.b16 %v344, %v342
      %v347 = vpack.c.b16 %v345, %v343
      %v382 = vunpack.c.l.b16 %v306
      %v383 = vunpack.c.h.b16 %v306
      %v384 = vunpack.c.l.b16 %v307
      %v385 = vunpack.c.h.b16 %v307
      %v386 = vunpack.c.l.b16 %v308
      %v387 = vunpack.c.h.b16 %v308
      %v388 = vunpack.c.l.b16 %v309
      %v389 = vunpack.c.h.b16 %v309
      %v390 = vunpack.c.l.b16 %v310
      %v391 = vunpack.c.h.b16 %v310
      %v392 = vunpack.c.l.b16 %v311
      %v393 = vunpack.c.h.b16 %v311
      %v394 = vunpack.c.l.b16 %v312
      %v395 = vunpack.c.h.b16 %v312
      %v396 = vunpack.c.l.b16 %v313
      %v397 = vunpack.c.h.b16 %v313
      %v398 = vunpack.c.l.b16 %v314
      %v399 = vunpack.c.h.b16 %v314
      %v400 = vunpack.c.l.b16 %v315
      %v401 = vunpack.c.h.b16 %v315
      %v402 = vunpack.c.l.b16 %v316
      %v403 = vunpack.c.h.b16 %v316
      %v404 = vunpack.c.l.b16 %v317
      %v405 = vunpack.c.h.b16 %v317
      %v406 = vunpack.c.l.b16 %v318
      %v407 = vunpack.c.h.b16 %v318
      %v408 = vunpack.c.l.b16 %v319
      %v409 = vunpack.c.h.b16 %v319
      %v410 = vunpack.c.l.b16 %v320
      %v411 = vunpack.c.h.b16 %v320
      %v412 = vunpack.c.l.b16 %v321
      %v413 = vunpack.c.h.b16 %v321
      %v414 = vunpack.c.l.b16 %v322
      %v415 = vunpack.c.h.b16 %v322
      %v416 = vunpack.c.l.b16 %v323
      %v417 = vunpack.c.h.b16 %v323
      %v418 = vunpack.c.l.b16 %v324
      %v419 = vunpack.c.h.b16 %v324
      %v420 = vunpack.c.l.b16 %v325
      %v421 = vunpack.c.h.b16 %v325
      %v422 = vunpack.c.l.b16 %v326
      %v423 = vunpack.c.h.b16 %v326
      %v424 = vunpack.c.l.b16 %v327
      %v425 = vunpack.c.h.b16 %v327
      %v426 = vunpack.c.l.b16 %v328
      %v427 = vunpack.c.h.b16 %v328
      %v428 = vunpack.c.l.b16 %v329
      %v429 = vunpack.c.h.b16 %v329
      %v430 = vunpack.c.l.b16 %v330
      %v431 = vunpack.c.h.b16 %v330
      %v432 = vunpack.c.l.b16 %v331
      %v433 = vunpack.c.h.b16 %v331
      %v434 = vunpack.c.l.b16 %v332
      %v435 = vunpack.c.h.b16 %v332
      %v436 = vunpack.c.l.b16 %v333
      %v437 = vunpack.c.h.b16 %v333
      %v438 = vunpack.c.l.b16 %v334
      %v439 = vunpack.c.h.b16 %v334
      %v440 = vunpack.c.l.b16 %v335
      %v441 = vunpack.c.h.b16 %v335
      %v442 = vunpack.c.l.b16 %v336
      %v443 = vunpack.c.h.b16 %v336
      %v444 = vunpack.c.l.b16 %v337
      %v445 = vunpack.c.h.b16 %v337
      %v446 = vpack.c.b16 %v384, %v382
      %v447 = vpack.c.b16 %v385, %v383
      %v448 = vpack.c.b16 %v388, %v386
      %v449 = vpack.c.b16 %v389, %v387
      %v450 = vpack.c.b16 %v392, %v390
      %v451 = vpack.c.b16 %v393, %v391
      %v452 = vpack.c.b16 %v396, %v394
      %v453 = vpack.c.b16 %v397, %v395
      %v454 = vpack.c.b16 %v400, %v398
      %v455 = vpack.c.b16 %v401, %v399
      %v456 = vpack.c.b16 %v404, %v402
      %v457 = vpack.c.b16 %v405, %v403
      %v458 = vpack.c.b16 %v408, %v406
      %v459 = vpack.c.b16 %v409, %v407
      %v460 = vpack.c.b16 %v412, %v410
      %v461 = vpack.c.b16 %v413, %v411
      %v462 = vpack.c.b16 %v416, %v414
      %v463 = vpack.c.b16 %v417, %v415
      %v464 = vpack.c.b16 %v420, %v418
      %v465 = vpack.c.b16 %v421, %v419
      %v466 = vpack.c.b16 %v424, %v422
      %v467 = vpack.c.b16 %v425, %v423
      %v468 = vpack.c.b16 %v428, %v426
      %v469 = vpack.c.b16 %v429, %v427
      %v470 = vpack.c.b16 %v432, %v430
      %v471 = vpack.c.b16 %v433, %v431
      %v472 = vpack.c.b16 %v436, %v434
      %v473 = vpack.c.b16 %v437, %v435
      %v474 = vpack.c.b16 %v440, %v438
      %v475 = vpack.c.b16 %v441, %v439
      %v476 = vpack.c.b16 %v444, %v442
      %v477 = vpack.c.b16 %v445, %v443
      %510 = vmatpush.bf16.msra.mxu0 %v460
      %511 = vmatpush.bf16.msra.mxu0 %v458
      %512 = vmatpush.bf16.msra.mxu0 %v456
      %513 = vmatpush.bf16.msra.mxu0 %v454
      %514 = vmatpush.bf16.msra.mxu0 %v452
      %515 = vmatpush.bf16.msra.mxu0 %v450
      %516 = vmatpush.bf16.msra.mxu0 %v448
      %517 = vmatpush.bf16.msra.mxu0 %v446
      %518 = vmatmul.bf16.gmra.mxu0 %v346
      %v519 = vpop.f32.mrf.mxu0
      %v520 = vadd.f32 0.0, %v519
      %v521 = vpop.f32.mrf.mxu0
      %v522 = vadd.f32 0.0, %v521
      %523 = vdwg.mxu0
      %524 = vmatpush.bf16.msra.mxu0 %v476
      %525 = vmatpush.bf16.msra.mxu0 %v474
      %526 = vmatpush.bf16.msra.mxu0 %v472
      %527 = vmatpush.bf16.msra.mxu0 %v470
      %528 = vmatpush.bf16.msra.mxu0 %v468
      %529 = vmatpush.bf16.msra.mxu0 %v466
      %530 = vmatpush.bf16.msra.mxu0 %v464
      %531 = vmatpush.bf16.msra.mxu0 %v462
      %532 = vmatmul.bf16.gmra.mxu0 %v347
      %v533 = vpop.f32.mrf.mxu0
      %v534 = vadd.f32 %v520, %v533
      %v535 = vpop.f32.mrf.mxu0
      %v536 = vadd.f32 %v522, %v535
      %537 = vdwg.mxu0
      %538 = vmatpush.bf16.msra.mxu0 %v461
      %539 = vmatpush.bf16.msra.mxu0 %v459
      %540 = vmatpush.bf16.msra.mxu0 %v457
      %541 = vmatpush.bf16.msra.mxu0 %v455
      %542 = vmatpush.bf16.msra.mxu0 %v453
      %543 = vmatpush.bf16.msra.mxu0 %v451
      %544 = vmatpush.bf16.msra.mxu0 %v449
      %545 = vmatpush.bf16.msra.mxu0 %v447
      %546 = vmatmul.bf16.gmra.mxu0 %v346
      %v547 = vpop.f32.mrf.mxu0
      %v548 = vadd.f32 0.0, %v547
      %v549 = vpop.f32.mrf.mxu0
      %v550 = vadd.f32 0.0, %v549
      %551 = vdwg.mxu0
      %552 = vmatpush.bf16.msra.mxu0 %v477
      %553 = vmatpush.bf16.msra.mxu0 %v475
      %554 = vmatpush.bf16.msra.mxu0 %v473
      %555 = vmatpush.bf16.msra.mxu0 %v471
      %556 = vmatpush.bf16.msra.mxu0 %v469
      %557 = vmatpush.bf16.msra.mxu0 %v467
      %558 = vmatpush.bf16.msra.mxu0 %v465
      %559 = vmatpush.bf16.msra.mxu0 %v463
      %560 = vmatmul.bf16.gmra.mxu0 %v347
      %v561 = vpop.f32.mrf.mxu0
      %v562 = vadd.f32 %v548, %v561
      %v563 = vpop.f32.mrf.mxu0
      %v564 = vadd.f32 %v550, %v563
      %565 = vdwg.mxu0
      %v566 = vld [vmem:[%s2] sm:$0xff]
      %v567 = vld [vmem:[%s2 + $0x8] sm:$0xff]
      %569 = vset.pattern.permute.xlu0 0
      %570 = vperm.xlu0 %569, %v566
      %v571 = vpop.permute.xlu0 %570
      %574 = vset.pattern.permute.xlu0 0
      %575 = vperm.xlu0 %574, %v567
      %v576 = vpop.permute.xlu0 %575
      %v578 = vmul.f32 %v534, %v571
      %v579 = vmul.f32 %v562, %v571
      %v580 = vmul.f32 %v536, %v576
      %v581 = vmul.f32 %v564, %v576
      %v582 = vld [vmem:[%s3] sm:$0xff]
      %v583 = vld [vmem:[%s3 + $0x8] sm:$0xff]
      %585 = vset.pattern.permute.xlu0 0
      %586 = vperm.xlu0 %585, %v582
      %v587 = vpop.permute.xlu0 %586
      %590 = vset.pattern.permute.xlu0 0
      %591 = vperm.xlu0 %590, %v583
      %v592 = vpop.permute.xlu0 %591
      %v594 = vadd.f32 %v578, %v587
      %v595 = vadd.f32 %v579, %v587
      %v596 = vadd.f32 %v580, %v592
      %v597 = vadd.f32 %v581, %v592
      %v598 = vmax.f32 %v594, 0.0
      %v599 = vmax.f32 %v595, 0.0
      %v600 = vmax.f32 %v596, 0.0
      %v601 = vmax.f32 %v597, 0.0
      %v602 = vadd.f32 %v598, %v600
      %v603 = vadd.f32 %v599, %v601
      %v604 = vadd.f32 %v602, %v603
      %605 = vadd.xlane.f32.xlu0 %v604
      %v606 = vpop.xlane.xlu0 %605
      %v607 = vmul.f32 %v606, 0.00390625
      %v608 = vld [vmem:[%s4] sm:$0xff]
      %v609 = vmul.f32 %v608, %v607
      %vm610 = vcmask 31744
      %v611 = vsel %vm610, %v609, 0.0
      %v612 = vrot.slane %v611, 4
      %v613 = vadd.f32 %v611, %v612
      %v614 = vrot.slane %v613, 2
      %v615 = vadd.f32 %v613, %v614
      %v616 = vrot.slane %v615, 1
      %v617 = vadd.f32 %v615, %v616
      %v618 = vld [vmem:[%s5] sm:$0x1]
      %v619 = vadd.f32 %v617, %v618
      %v620 = vld [vmem:[%s6] sm:$0xff]
      %v621 = vld [vmem:[%s6 + $0x8] sm:$0xff]
      %v622 = vld [vmem:[%s7] sm:$0xff]
      %v623 = vld [vmem:[%s7 + $0x8] sm:$0xff]
      %v624 = vperm.slane %v619, 0
      %v625 = vmul.f32 %v620, %v624
      %v626 = vsel %vm610, %v625, 0.0
      %627 = vadd.xlane.f32.xlu0 %v626
      %v628 = vpop.xlane.xlu0 %627
      %v629 = vadd.f32 %v628, %v622
      %v630 = vmul.f32 %v621, %v624
      %v631 = vsel %vm610, %v630, 0.0
      %632 = vadd.xlane.f32.xlu0 %v631
      %v633 = vpop.xlane.xlu0 %632
      %v634 = vadd.f32 %v633, %v623
      %v635 = vmax.f32 %v629, %v634
      %v636 = vsub.f32 %v629, %v635
      %v637 = vmul.f32 %v636, 1.442695
      %v638 = vpow.pop %v637
      %v639 = vsub.f32 %v634, %v635
      %v640 = vmul.f32 %v639, 1.442695
      %v641 = vpow.pop %v640
      %v642 = vadd.f32 %v638, %v641
      %v643 = vrcp.pop %v642
      %v644 = vmul.f32 %v638, %v643
      %646 = vset.pattern.permute.xlu0 0
      %647 = vperm.xlu0 %646, %v644
      %v648 = vpop.permute.xlu0 %647
      %v650 = vmul.f32 %v648, %v598
      %v651 = vmul.f32 %v648, %v599
      %v652 = vmul.f32 %v641, %v643
      %654 = vset.pattern.permute.xlu0 0
      %655 = vperm.xlu0 %654, %v652
      %v656 = vpop.permute.xlu0 %655
      %v658 = vmul.f32 %v656, %v600
      %v659 = vmul.f32 %v656, %v601
      %v660 = vadd.f32 %v650, %v658
      %v661 = vadd.f32 %v651, %v659
      %662 = vst [vmem:[%s305] sm:$0xff] %v660
      %663 = vst [vmem:[%s305 + $0x8] sm:$0xff] %v661
      %p664 = scmp.lt.s32.totalorder %s19, 1
      %s665 = scalar_select %p664, %s19, 1
      %s666 = smul.addr %s665, 2
      %s667 = smul.addr %s666, 8
      %s668 = scalar_lea.vmem %s8, %s667
      // Predicated region
      $region53: #{skconv_forward.1} parent=51 // pred_check
        %p669 = pneg %p210
      $region54: #{skconv_forward.1} parent=51 // pred_check_branch
        %671 = sbr.rel (%p669) target = $region56
      $region55: #{skconv_forward.1} parent=51 // pred_region
        _
      $region56: #{skconv_forward.1} parent=51 // pred_fallthru
        _
    $region52: #{skconv_forward.1} parent=5 // pred_fallthru
      _
    %p672 = scmp.le.s32.totalorder 2, %s14
    // Predicated region
    $region57: #{skconv_forward.1} parent=5 // pred_check
      %p673 = pneg %p672
    $region58: #{skconv_forward.1} parent=5 // pred_check_branch
      %675 = sbr.rel (%p673) target = $region60
    $region59: #{skconv_forward.1} parent=5 // pred_region
      %s676 = ssub.s32 %s14, 2
      // Predicated region
      $region61: #{skconv_forward.1} parent=59 // pred_check
        %p677 = pneg %p216
      $region62: #{skconv_forward.1} parent=59 // pred_check_branch
        %679 = sbr.rel (%p677) target = $region64
      $region63: #{skconv_forward.1} parent=59 // pred_region
        %p680 = scmp.lt.s32.totalorder %s20, 1
        %s681 = scalar_select %p680, %s20, 1
        %s682 = smul.addr %s681, 2
        %s683 = smul.addr %s682, 8
        %s684 = scalar_lea.vmem %s8, %s683
      $region64: #{skconv_forward.1} parent=59 // pred_fallthru
        _
    $region60: #{skconv_forward.1} parent=5 // pred_fallthru
      _
  $region6: #{skconv_forward.1} parent=0 // loop_footer
    %s18 = sadd.s32 1, %s14
  $region7: #{skconv_forward.1} parent=0 // loop_footer_branch
    %13 = sbr.rel target = $region3
  $region8: #{skconv_forward.1} parent=0 // loop_exit
    _

</llo_original>
